<compile_context>
chip_gen: v7x
topology: tpu7x:2x2x1
jax: 0.10.0
libtpu: 0.0.40
codegen_flags: <defaults>
</compile_context>

<pallas_src>
import functools

import jax
import jax.numpy as jnp
from jax.experimental import pallas as pl
from jax.experimental.pallas import tpu as pltpu

LANE = 128  # TPU vreg lane width


def _round_up(n: int, m: int) -> int:
    return ((n + m - 1) // m) * m


def _fused_mlp_kernel(x_ref, *refs, num_layers: int):
    """Whole MLP on one batch tile.

    refs = (w0, wstack, bstack, out) when num_layers > 1
         = (w0, bstack, out)         when num_layers == 1
    """
    o_ref = refs[-1]
    w0_ref = refs[0]
    if num_layers > 1:
        wstack_ref = refs[1]
        bstack_ref = refs[2]
    else:
        wstack_ref = None
        bstack_ref = refs[1]

    h = x_ref[...]
    # Layer 0: real in-dim, padded out-dim.
    h = jnp.dot(h, w0_ref[...], preferred_element_type=jnp.float32)
    h = h + bstack_ref[0]  # (bm, P) + (1, P) broadcast
    if num_layers > 1:
        h = jnp.maximum(h, 0.0)  # ReLU; dropout == identity (eval mode)
        for i in range(1, num_layers):  # unrolled; static indices into the stacks
            h = jnp.dot(h, wstack_ref[i - 1], preferred_element_type=jnp.float32)
            h = h + bstack_ref[i]
            if i != num_layers - 1:
                h = jnp.maximum(h, 0.0)
    o_ref[...] = h.astype(o_ref.dtype)


def init_dqn_params(key, input_dim, hidden_layers, output_dim):
    """Xavier-uniform weights stored as (in, out) (transposed vs PyTorch) + bias=0.01."""
    dims = [input_dim] + list(hidden_layers) + [output_dim]
    params = []
    for i in range(len(dims) - 1):
        fan_in, fan_out = dims[i], dims[i + 1]
        key, sub = jax.random.split(key)
        limit = (6.0 / (fan_in + fan_out)) ** 0.5
        w = jax.random.uniform(
            sub, (fan_in, fan_out), dtype=jnp.float32, minval=-limit, maxval=limit
        )
        b = jnp.full((1, fan_out), 0.01, dtype=jnp.float32)
        params.append((w, b))
    return params


def pack_params(params):
    """Pad & stack params once at init into 3 kernel operands.

    Returns dict with:
      w0     : (in_dim, P)      first-layer weight, real in-dim, padded out-dim
      wstack : (L-1, P, P)      remaining weights, both dims padded (or None)
      bstack : (L, 1, P)        all biases, padded
      dims   : real layer dims [in, h1, ..., out]
    """
    dims = [params[0][0].shape[0]] + [w.shape[1] for w, _ in params]
    num_layers = len(params)
    # Common padded feature width for every hidden/output dim.
    P = max(_round_up(d, LANE) for d in dims[1:])

    in_dim = dims[0]
    w0 = jnp.zeros((in_dim, P), jnp.float32).at[:, : dims[1]].set(params[0][0])

    if num_layers > 1:
        wstack = jnp.zeros((num_layers - 1, P, P), jnp.float32)
        for i in range(1, num_layers):
            w, _ = params[i]
            wstack = wstack.at[i - 1, : w.shape[0], : w.shape[1]].set(w)
    else:
        wstack = None

    bstack = jnp.zeros((num_layers, 1, P), jnp.float32)
    for i, (_, b) in enumerate(params):
        bstack = bstack.at[i, :, : b.shape[1]].set(b)

    return {"w0": w0, "wstack": wstack, "bstack": bstack, "dims": dims}


def dqn_forward(packed, x, *, block_batch=256):
    """Fused forward pass.

    x: (batch, input_dim) f32 -> (batch, P) f32 lane-dense slab; the real
    Q-values live in the first output_dim lanes (consumer can argmax over them
    or slice them out; we keep the slab to avoid a per-call relayout copy).
    """
    w0, wstack, bstack, dims = packed["w0"], packed["wstack"], packed["bstack"], packed["dims"]
    batch, in_dim = x.shape
    assert in_dim == dims[0]
    P = w0.shape[1]
    num_layers = bstack.shape[0]

    # Grid: one step on single-TC chips / small batches; split into "parallel"
    # batch tiles only when per-TC work is big enough to hide the overhead
    # (v7x 2-TC sharding).
    if batch >= 1024 and batch % block_batch == 0 and batch // block_batch >= 4:
        bm = block_batch
        grid = (batch // bm,)
        semantics = ("parallel",)
    else:
        bm = batch
        grid = (1,)
        semantics = ("arbitrary",)

    in_specs = [pl.BlockSpec((bm, in_dim), lambda i: (i, 0))]
    operands = [x, w0]
    in_specs.append(pl.BlockSpec(w0.shape, lambda i: (0, 0)))
    if wstack is not None:
        operands.append(wstack)
        in_specs.append(pl.BlockSpec(wstack.shape, lambda i: (0, 0, 0)))
    operands.append(bstack)
    in_specs.append(pl.BlockSpec(bstack.shape, lambda i: (0, 0, 0)))

    # Cost estimate on REAL dims (flops) / actual transferred arrays (bytes).
    flops = sum(2 * batch * dims[i] * dims[i + 1] for i in range(num_layers))
    bytes_accessed = 4 * (
        x.size
        + w0.size
        + (wstack.size if wstack is not None else 0)
        + bstack.size
        + batch * P
    )

    kernel = functools.partial(_fused_mlp_kernel, num_layers=num_layers)
    out = pl.pallas_call(
        kernel,
        out_shape=jax.ShapeDtypeStruct((batch, P), jnp.float32),
        grid=grid,
        in_specs=in_specs,
        out_specs=pl.BlockSpec((bm, P), lambda i: (i, 0)),
        compiler_params=pltpu.CompilerParams(
            dimension_semantics=semantics,
        ),
        cost_estimate=pl.CostEstimate(
            flops=flops, transcendentals=0, bytes_accessed=bytes_accessed
        ),
    )(*operands)

    return out


if __name__ == "__main__":
    # Small shapes consistent with the module: state_dim=32, hidden=[64, 32],
    # actions=8, batch=64 (single grid step; whole problem lives in VMEM).
    input_dim = 32
    hidden_layers = [64, 32]
    output_dim = 8
    batch = 64

    key = jax.random.PRNGKey(0)
    key_x, key_p = jax.random.split(key)

    x = jax.random.normal(key_x, (batch, input_dim), dtype=jnp.float32)
    params = init_dqn_params(key_p, input_dim, hidden_layers, output_dim)
    packed = pack_params(params)  # pad + stack once at init, not per call

    q_slab = dqn_forward(packed, x)
    jax.block_until_ready(q_slab)

    # Sanity check against pure-JAX reference on the un-padded params.
    ref = x
    for i, (w, b) in enumerate(params):
        ref = ref @ w + b
        if i != len(params) - 1:
            ref = jnp.maximum(ref, 0.0)

    q_values = q_slab[:, :output_dim]  # slice only for the check; hot path keeps the slab
    assert q_slab.shape == (batch, packed["w0"].shape[1])
    assert q_values.shape == (batch, output_dim)
    assert jnp.allclose(q_values, ref, atol=1e-4, rtol=1e-4)
    # Padded lanes must be exactly zero (proves padding is inert).
    assert jnp.all(q_slab[:, output_dim:] == 0.0)

    print("KERNEL_OK")
</pallas_src>

<mosaic_0001>
module attributes {stable_mosaic.version = 11 : i64} {
  func.func @_fused_mlp_kernel(%arg0: i32, %arg1: memref<64x32xf32, #tpu.memory_space<vmem>>, %arg2: memref<32x128xf32, #tpu.memory_space<vmem>>, %arg3: memref<2x128x128xf32, #tpu.memory_space<vmem>>, %arg4: memref<3x1x128xf32, #tpu.memory_space<vmem>>, %arg5: memref<64x128xf32, #tpu.memory_space<vmem>>) attributes {dimension_semantics = [#tpu.dimension_semantics<arbitrary>], iteration_bounds = array<i64: 1>, scalar_prefetch = 0 : i64, scratch_operands = 0 : i64, tpu.core_type = #tpu.core_type<tc>, window_params = [{transform_indices = @transform_0, window_bounds = array<i64: 64, 32>}, {pipeline_mode = #tpu.pipeline_mode<synchronous>, transform_indices = @transform_1, window_bounds = array<i64: 32, 128>}, {pipeline_mode = #tpu.pipeline_mode<synchronous>, transform_indices = @transform_2, window_bounds = array<i64: 2, 128, 128>}, {pipeline_mode = #tpu.pipeline_mode<synchronous>, transform_indices = @transform_3, window_bounds = array<i64: 3, 1, 128>}, {transform_indices = @transform_4, window_bounds = array<i64: 64, 128>}]} {
    %c0 = arith.constant 0 : index
    %c0_0 = arith.constant 0 : index
    %0 = vector.load %arg1[%c0, %c0_0] : memref<64x32xf32, #tpu.memory_space<vmem>>, vector<64x32xf32>
    %c0_1 = arith.constant 0 : index
    %c0_2 = arith.constant 0 : index
    %1 = vector.load %arg2[%c0_1, %c0_2] : memref<32x128xf32, #tpu.memory_space<vmem>>, vector<32x128xf32>
    %cst = arith.constant dense<0.000000e+00> : vector<64x128xf32>
    %2 = tpu.matmul %0, %1, %cst {dimension_numbers = #tpu.dot_dimension_numbers<[1], [0], [0], [1], [0, 0, 1, 1], [], []>} : vector<64x32xf32>, vector<32x128xf32>, vector<64x128xf32> -> vector<64x128xf32>
    %c0_3 = arith.constant 0 : index
    %c0_4 = arith.constant 0 : index
    %c0_5 = arith.constant 0 : index
    %3 = vector.load %arg4[%c0_3, %c0_4, %c0_5] : memref<3x1x128xf32, #tpu.memory_space<vmem>>, vector<1x1x128xf32>
    %4 = vector.shape_cast %3 : vector<1x1x128xf32> to vector<1x128xf32>
    %5 = vector.broadcast %4 : vector<1x128xf32> to vector<64x128xf32>
    %6 = arith.addf %2, %5 : vector<64x128xf32>
    %cst_6 = arith.constant 0.000000e+00 : f32
    %7 = vector.broadcast %cst_6 : f32 to vector<64x128xf32>
    %8 = arith.maximumf %6, %7 : vector<64x128xf32>
    %c0_7 = arith.constant 0 : index
    %c0_8 = arith.constant 0 : index
    %c0_9 = arith.constant 0 : index
    %9 = vector.load %arg3[%c0_7, %c0_8, %c0_9] : memref<2x128x128xf32, #tpu.memory_space<vmem>>, vector<1x128x128xf32>
    %10 = vector.shape_cast %9 : vector<1x128x128xf32> to vector<128x128xf32>
    %cst_10 = arith.constant dense<0.000000e+00> : vector<64x128xf32>
    %11 = tpu.matmul %8, %10, %cst_10 {dimension_numbers = #tpu.dot_dimension_numbers<[1], [0], [0], [1], [0, 0, 1, 1], [], []>} : vector<64x128xf32>, vector<128x128xf32>, vector<64x128xf32> -> vector<64x128xf32>
    %c1 = arith.constant 1 : index
    %c0_11 = arith.constant 0 : index
    %c0_12 = arith.constant 0 : index
    %12 = vector.load %arg4[%c1, %c0_11, %c0_12] : memref<3x1x128xf32, #tpu.memory_space<vmem>>, vector<1x1x128xf32>
    %13 = vector.shape_cast %12 : vector<1x1x128xf32> to vector<1x128xf32>
    %14 = vector.broadcast %13 : vector<1x128xf32> to vector<64x128xf32>
    %15 = arith.addf %11, %14 : vector<64x128xf32>
    %cst_13 = arith.constant 0.000000e+00 : f32
    %16 = vector.broadcast %cst_13 : f32 to vector<64x128xf32>
    %17 = arith.maximumf %15, %16 : vector<64x128xf32>
    %c1_14 = arith.constant 1 : index
    %c0_15 = arith.constant 0 : index
    %c0_16 = arith.constant 0 : index
    %18 = vector.load %arg3[%c1_14, %c0_15, %c0_16] : memref<2x128x128xf32, #tpu.memory_space<vmem>>, vector<1x128x128xf32>
    %19 = vector.shape_cast %18 : vector<1x128x128xf32> to vector<128x128xf32>
    %cst_17 = arith.constant dense<0.000000e+00> : vector<64x128xf32>
    %20 = tpu.matmul %17, %19, %cst_17 {dimension_numbers = #tpu.dot_dimension_numbers<[1], [0], [0], [1], [0, 0, 1, 1], [], []>} : vector<64x128xf32>, vector<128x128xf32>, vector<64x128xf32> -> vector<64x128xf32>
    %c2 = arith.constant 2 : index
    %c0_18 = arith.constant 0 : index
    %c0_19 = arith.constant 0 : index
    %21 = vector.load %arg4[%c2, %c0_18, %c0_19] : memref<3x1x128xf32, #tpu.memory_space<vmem>>, vector<1x1x128xf32>
    %22 = vector.shape_cast %21 : vector<1x1x128xf32> to vector<1x128xf32>
    %23 = vector.broadcast %22 : vector<1x128xf32> to vector<64x128xf32>
    %24 = arith.addf %20, %23 : vector<64x128xf32>
    %c0_20 = arith.constant 0 : index
    %c0_21 = arith.constant 0 : index
    %25 = vector.load %arg5[%c0_20, %c0_21] : memref<64x128xf32, #tpu.memory_space<vmem>>, vector<64x128xf32>
    tpu.vector_store %arg5[%c0_20, %c0_21], %24 {strides = array<i32>} : memref<64x128xf32, #tpu.memory_space<vmem>>, vector<64x128xf32>,
    return
  }
  func.func @transform_0(%arg0: i32) -> (i32, i32) {
    %c0_i32 = arith.constant 0 : i32
    %c0_i32_0 = arith.constant 0 : i32
    return %arg0, %c0_i32 : i32, i32
  }
  func.func @transform_1(%arg0: i32) -> (i32, i32) {
    %c0_i32 = arith.constant 0 : i32
    %c0_i32_0 = arith.constant 0 : i32
    %c0_i32_1 = arith.constant 0 : i32
    return %c0_i32, %c0_i32_0 : i32, i32
  }
  func.func @transform_2(%arg0: i32) -> (i32, i32, i32) {
    %c0_i32 = arith.constant 0 : i32
    %c0_i32_0 = arith.constant 0 : i32
    %c0_i32_1 = arith.constant 0 : i32
    %c0_i32_2 = arith.constant 0 : i32
    return %c0_i32, %c0_i32_0, %c0_i32_1 : i32, i32, i32
  }
  func.func @transform_3(%arg0: i32) -> (i32, i32, i32) {
    %c0_i32 = arith.constant 0 : i32
    %c0_i32_0 = arith.constant 0 : i32
    %c0_i32_1 = arith.constant 0 : i32
    %c0_i32_2 = arith.constant 0 : i32
    return %c0_i32, %c0_i32_0, %c0_i32_1 : i32, i32, i32
  }
  func.func @transform_4(%arg0: i32) -> (i32, i32) {
    %c0_i32 = arith.constant 0 : i32
    %c0_i32_0 = arith.constant 0 : i32
    return %arg0, %c0_i32 : i32, i32
  }
}

</mosaic_0001>

<llo_original>
// kernel: tpu_custom_call.1
$region0: #{tpu_custom_call.1}
  #allocation0 [shape = 'u32[]', space=smem, size = 0x4, offset = 0x4, fixed_abs, tag = 'smem constant byte address 0x4 - core index']
  #allocation1 [shape = 'u32[144,128]{1,0:T(1,128)}', space=vmem, size = 0x12000, scoped, tag = 'internal scratch']
  %s0 = inlined_call_operand.vmem [shape: f32[64,32], index: 0, kind: input, shape index: {}]
  %s1 = inlined_call_operand.vmem [shape: f32[32,128], index: 1, kind: input, shape index: {}]
  %s2 = inlined_call_operand.hbm [shape: f32[2,128,128], index: 2, kind: input, shape index: {}]
  %s3 = inlined_call_operand.vmem [shape: f32[3,1,128], index: 3, kind: input, shape index: {}]
  %s4 = inlined_call_operand.hbm [shape: f32[64,128], index: 4, kind: output, shape index: {}]
  %s5 = sld [smem:[#allocation0]]
  $region30: #{tpu_custom_call.1} parent=0
    _
  %s7 = ssub.s32 1, %s5
  %s8 = scalar_select 0, %s7, %s5
  $region1: #{tpu_custom_call.1} parent=0
    #allocation2 [shape = 'u8[131072]{0}', space=vmem, size = 0x20000, scoped, tag = 'input window, operand 2, single buffered']
    #allocation3 [shape = 's32[1]{0}', space=sflag, size = 0x4, scoped, tag = 'scoped memory for tpu_custom_call.1']
    #allocation4 [shape = 's32[1]{0}', space=sflag, size = 0x4, scoped, tag = 'scoped memory for tpu_custom_call.1']
    #allocation5 [shape = 'u8[32768]{0}', space=vmem, size = 0x8000, scoped, tag = 'output window, operand 0, single buffered']
    %9 = vsyncpa [#allocation3], 0
    %10 = vsyncpa [#allocation4], 0
    // Predicated region
    $region2: #{tpu_custom_call.1} parent=1 // pred_check
      _
    $region3: #{tpu_custom_call.1} parent=1 // pred_check_branch
      %12 = sbr.rel (0) target = $region5
    $region4: #{tpu_custom_call.1} parent=1 // pred_region
      _
    $region5: #{tpu_custom_call.1} parent=1 // pred_fallthru
      _
    // Predicated region
    $region6: #{tpu_custom_call.1} parent=1 // pred_check
      _
    $region7: #{tpu_custom_call.1} parent=1 // pred_check_branch
      %14 = sbr.rel (0) target = $region9
    $region8: #{tpu_custom_call.1} parent=1 // pred_region
      _
    $region9: #{tpu_custom_call.1} parent=1 // pred_fallthru
      _
    // Predicated region
    $region10: #{tpu_custom_call.1} parent=1 // pred_check
      _
    $region11: #{tpu_custom_call.1} parent=1 // pred_check_branch
      %16 = sbr.rel (0) target = $region13
    $region12: #{tpu_custom_call.1} parent=1 // pred_region
      %s18 = ssub.s32 4096, 4096
      %19 = vsyncadd [#allocation3], %s18
      %s20 = sshll.u32 [#allocation2], 4
      %s21 = int_to_ptr.vmem [resolvable:$true] %s20
      %26 = dma.hbm_to_vmem [thread:$0]  %s2, 4096, %s21, [#allocation3], 128, 128, 8
    $region13: #{tpu_custom_call.1} parent=1 // pred_fallthru
      _
    // Predicated region
    $region14: #{tpu_custom_call.1} parent=1 // pred_check
      _
    $region15: #{tpu_custom_call.1} parent=1 // pred_check_branch
      %28 = sbr.rel (0) target = $region17
    $region16: #{tpu_custom_call.1} parent=1 // pred_region
      _
    $region17: #{tpu_custom_call.1} parent=1 // pred_fallthru
      _
    // Predicated region
    $region18: #{tpu_custom_call.1} parent=1 // pred_check
      _
    $region19: #{tpu_custom_call.1} parent=1 // pred_check_branch
      %30 = sbr.rel (0) target = $region21
    $region20: #{tpu_custom_call.1} parent=1 // pred_region
      %31 = dma.done [#allocation3], 4096
    $region21: #{tpu_custom_call.1} parent=1 // pred_fallthru
      _
    %v32 = vld [vmem:[%s0] sm:$0xff]
    %v33 = vld [vmem:[%s0 + $0x8] sm:$0xff]
    %v34 = vld [vmem:[%s0 + $0x10] sm:$0xff]
    %v35 = vld [vmem:[%s0 + $0x18] sm:$0xff]
    %v36 = vld [vmem:[%s0 + $0x20] sm:$0xff]
    %v37 = vld [vmem:[%s0 + $0x28] sm:$0xff]
    %v38 = vld [vmem:[%s0 + $0x30] sm:$0xff]
    %v39 = vld [vmem:[%s0 + $0x38] sm:$0xff]
    %v40 = vld [vmem:[%s1] sm:$0xff]
    %v41 = vld [vmem:[%s1 + $0x8] sm:$0xff]
    %v42 = vld [vmem:[%s1 + $0x10] sm:$0xff]
    %v43 = vld [vmem:[%s1 + $0x18] sm:$0xff]
    %v44 = vld [vmem:[%s3] sm:$0x1]
    %v46 = vlaneseq
    %v47 = vshrl.u32 %v46, 7
    %v48 = vsub.s32 0, %v47
    %v49 = vrot.slane %v44, %v48
    %vm51 = vcmask 261120
    %v53 = vsel %vm51, %v32, 0
    %v56 = vsel %vm51, %v33, 0
    %v59 = vsel %vm51, %v34, 0
    %v62 = vsel %vm51, %v35, 0
    %v65 = vsel %vm51, %v36, 0
    %v68 = vsel %vm51, %v37, 0
    %v71 = vsel %vm51, %v38, 0
    %v74 = vsel %vm51, %v39, 0
    %76 = vmatprep.subr.mxu0 0.0
    %77 = vmatpush1.msra.mxu0 %v40
    %78 = vmatprep.subr.mxu0 0.0
    %79 = vmatpush1.msra.mxu0 %v41
    %80 = vmatprep.subr.mxu0 0.0
    %81 = vmatpush1.msra.mxu0 %v42
    %82 = vmatprep.subr.mxu0 0.0
    %83 = vmatpush1.msra.mxu0 %v43
    %84 = vmatprep.subr.mxu0 0.0
    %85 = vmatpush1.msra.mxu0 0.0
    %86 = vmatprep.subr.mxu0 0.0
    %87 = vmatpush1.msra.mxu0 0.0
    %88 = vmatprep.subr.mxu0 0.0
    %89 = vmatpush1.msra.mxu0 0.0
    %90 = vmatprep.subr.mxu0 0.0
    %91 = vmatpush1.msra.mxu0 0.0
    %92 = vmatprep.subr.mxu0 0.0
    %93 = vmatpush1.msra.mxu0 0.0
    %94 = vmatprep.subr.mxu0 0.0
    %95 = vmatpush1.msra.mxu0 0.0
    %96 = vmatprep.subr.mxu0 0.0
    %97 = vmatpush1.msra.mxu0 0.0
    %98 = vmatprep.subr.mxu0 0.0
    %99 = vmatpush1.msra.mxu0 0.0
    %100 = vmatprep.subr.mxu0 0.0
    %101 = vmatpush1.msra.mxu0 0.0
    %102 = vmatprep.subr.mxu0 0.0
    %103 = vmatpush1.msra.mxu0 0.0
    %104 = vmatprep.subr.mxu0 0.0
    %105 = vmatpush1.msra.mxu0 0.0
    %106 = vmatprep.subr.mxu0 0.0
    %107 = vmatpush1.msra.mxu0 0.0
    %108 = vmatprep.subr.mxu0 0.0
    %109 = vmatpush1.msra.mxu0 0.0
    %110 = vmatprep.subr.mxu0 0.0
    %111 = vmatpush1.msra.mxu0 0.0
    %112 = vmatprep.subr.mxu0 0.0
    %113 = vmatpush1.msra.mxu0 0.0
    %114 = vmatprep.subr.mxu0 0.0
    %115 = vmatpush1.msra.mxu0 0.0
    %116 = vmatprep.subr.mxu0 0.0
    %117 = vmatpush1.msra.mxu0 0.0
    %118 = vmatprep.subr.mxu0 0.0
    %119 = vmatpush1.msra.mxu0 0.0
    %120 = vmatprep.subr.mxu0 0.0
    %121 = vmatpush1.msra.mxu0 0.0
    %122 = vmatprep.subr.mxu0 0.0
    %123 = vmatpush1.msra.mxu0 0.0
    %124 = vmatprep.subr.mxu0 0.0
    %125 = vmatpush1.msra.mxu0 0.0
    %126 = vmatprep.subr.mxu0 0.0
    %127 = vmatpush1.msra.mxu0 0.0
    %128 = vmatprep.subr.mxu0 0.0
    %129 = vmatpush1.msra.mxu0 0.0
    %130 = vmatprep.subr.mxu0 0.0
    %131 = vmatpush1.msra.mxu0 0.0
    %132 = vmatprep.subr.mxu0 0.0
    %133 = vmatpush1.msra.mxu0 0.0
    %134 = vmatprep.subr.mxu0 0.0
    %135 = vmatpush1.msra.mxu0 0.0
    %136 = vmatprep.subr.mxu0 0.0
    %137 = vmatpush1.msra.mxu0 0.0
    %138 = vmatprep.subr.mxu0 0.0
    %139 = vmatpush1.msra.mxu0 0.0
    %140 = vmatprep.mubr.f32.mxu0 0.0
    %141 = vmatmul.mubr.f32.gmra.mrb[0].mxu0 %v53
    %v142 = vpop.f32.mrb[0].mxu0
    %v143 = vadd.f32 %v49, %v142
    %v144 = vpop.f32.mrb[0].mxu0
    %145 = vmatprep.mubr.f32.mxu0 0.0
    %146 = vmatmul.mubr.f32.gmra.mrb[0].mxu0 %v56
    %v147 = vpop.f32.mrb[0].mxu0
    %v148 = vadd.f32 %v49, %v147
    %v149 = vpop.f32.mrb[0].mxu0
    %150 = vmatprep.mubr.f32.mxu0 0.0
    %151 = vmatmul.mubr.f32.gmra.mrb[0].mxu0 %v59
    %v152 = vpop.f32.mrb[0].mxu0
    %v153 = vadd.f32 %v49, %v152
    %v154 = vpop.f32.mrb[0].mxu0
    %155 = vmatprep.mubr.f32.mxu0 0.0
    %156 = vmatmul.mubr.f32.gmra.mrb[0].mxu0 %v62
    %v157 = vpop.f32.mrb[0].mxu0
    %v158 = vadd.f32 %v49, %v157
    %v159 = vpop.f32.mrb[0].mxu0
    %160 = vmatprep.mubr.f32.mxu0 0.0
    %161 = vmatmul.mubr.f32.gmra.mrb[0].mxu0 %v65
    %v162 = vpop.f32.mrb[0].mxu0
    %v163 = vadd.f32 %v49, %v162
    %v164 = vpop.f32.mrb[0].mxu0
    %165 = vmatprep.mubr.f32.mxu0 0.0
    %166 = vmatmul.mubr.f32.gmra.mrb[0].mxu0 %v68
    %v167 = vpop.f32.mrb[0].mxu0
    %v168 = vadd.f32 %v49, %v167
    %v169 = vpop.f32.mrb[0].mxu0
    %170 = vmatprep.mubr.f32.mxu0 0.0
    %171 = vmatmul.mubr.f32.gmra.mrb[0].mxu0 %v71
    %v172 = vpop.f32.mrb[0].mxu0
    %v173 = vadd.f32 %v49, %v172
    %v174 = vpop.f32.mrb[0].mxu0
    %175 = vmatprep.mubr.f32.mxu0 0.0
    %176 = vmatmul.mubr.f32.gmra.mrb[0].mxu0 %v74
    %v177 = vpop.f32.mrb[0].mxu0
    %v178 = vadd.f32 %v49, %v177
    %v179 = vpop.f32.mrb[0].mxu0
    %180 = vdwg.mxu0
    %v181 = vmax.f32 %v143, 0.0
    %v182 = vmax.f32 %v148, 0.0
    %v183 = vmax.f32 %v153, 0.0
    %v184 = vmax.f32 %v158, 0.0
    %v185 = vmax.f32 %v163, 0.0
    %v186 = vmax.f32 %v168, 0.0
    %v187 = vmax.f32 %v173, 0.0
    %v188 = vmax.f32 %v178, 0.0
    %v189 = vld [vmem:[#allocation2] sm:$0xff]
    %v190 = vld [vmem:[#allocation2 + $0x8] sm:$0xff]
    %v191 = vld [vmem:[#allocation2 + $0x10] sm:$0xff]
    %v192 = vld [vmem:[#allocation2 + $0x18] sm:$0xff]
    %v193 = vld [vmem:[#allocation2 + $0x20] sm:$0xff]
    %v194 = vld [vmem:[#allocation2 + $0x28] sm:$0xff]
    %v195 = vld [vmem:[#allocation2 + $0x30] sm:$0xff]
    %v196 = vld [vmem:[#allocation2 + $0x38] sm:$0xff]
    %v197 = vld [vmem:[#allocation2 + $0x40] sm:$0xff]
    %v198 = vld [vmem:[#allocation2 + $0x48] sm:$0xff]
    %v199 = vld [vmem:[#allocation2 + $0x50] sm:$0xff]
    %v200 = vld [vmem:[#allocation2 + $0x58] sm:$0xff]
    %v201 = vld [vmem:[#allocation2 + $0x60] sm:$0xff]
    %v202 = vld [vmem:[#allocation2 + $0x68] sm:$0xff]
    %v203 = vld [vmem:[#allocation2 + $0x70] sm:$0xff]
    %v204 = vld [vmem:[#allocation2 + $0x78] sm:$0xff]
    %s205 = scalar_lea.vmem %s3, 1
    %v206 = vld [vmem:[%s205] sm:$0x1]
    %v208 = vlaneseq
    %v209 = vshrl.u32 %v208, 7
    %v210 = vsub.s32 0, %v209
    %v211 = vrot.slane %v206, %v210
    %213 = vmatprep.subr.mxu0 0.0
    %214 = vmatpush1.msra.mxu0 %v189
    %215 = vmatprep.subr.mxu0 0.0
    %216 = vmatpush1.msra.mxu0 %v190
    %217 = vmatprep.subr.mxu0 0.0
    %218 = vmatpush1.msra.mxu0 %v191
    %219 = vmatprep.subr.mxu0 0.0
    %220 = vmatpush1.msra.mxu0 %v192
    %221 = vmatprep.subr.mxu0 0.0
    %222 = vmatpush1.msra.mxu0 %v193
    %223 = vmatprep.subr.mxu0 0.0
    %224 = vmatpush1.msra.mxu0 %v194
    %225 = vmatprep.subr.mxu0 0.0
    %226 = vmatpush1.msra.mxu0 %v195
    %227 = vmatprep.subr.mxu0 0.0
    %228 = vmatpush1.msra.mxu0 %v196
    %229 = vmatprep.subr.mxu0 0.0
    %230 = vmatpush1.msra.mxu0 %v197
    %231 = vmatprep.subr.mxu0 0.0
    %232 = vmatpush1.msra.mxu0 %v198
    %233 = vmatprep.subr.mxu0 0.0
    %234 = vmatpush1.msra.mxu0 %v199
    %235 = vmatprep.subr.mxu0 0.0
    %236 = vmatpush1.msra.mxu0 %v200
    %237 = vmatprep.subr.mxu0 0.0
    %238 = vmatpush1.msra.mxu0 %v201
    %239 = vmatprep.subr.mxu0 0.0
    %240 = vmatpush1.msra.mxu0 %v202
    %241 = vmatprep.subr.mxu0 0.0
    %242 = vmatpush1.msra.mxu0 %v203
    %243 = vmatprep.subr.mxu0 0.0
    %244 = vmatpush1.msra.mxu0 %v204
    %245 = vmatprep.subr.mxu0 0.0
    %246 = vmatpush1.msra.mxu0 0.0
    %247 = vmatprep.subr.mxu0 0.0
    %248 = vmatpush1.msra.mxu0 0.0
    %249 = vmatprep.subr.mxu0 0.0
    %250 = vmatpush1.msra.mxu0 0.0
    %251 = vmatprep.subr.mxu0 0.0
    %252 = vmatpush1.msra.mxu0 0.0
    %253 = vmatprep.subr.mxu0 0.0
    %254 = vmatpush1.msra.mxu0 0.0
    %255 = vmatprep.subr.mxu0 0.0
    %256 = vmatpush1.msra.mxu0 0.0
    %257 = vmatprep.subr.mxu0 0.0
    %258 = vmatpush1.msra.mxu0 0.0
    %259 = vmatprep.subr.mxu0 0.0
    %260 = vmatpush1.msra.mxu0 0.0
    %261 = vmatprep.subr.mxu0 0.0
    %262 = vmatpush1.msra.mxu0 0.0
    %263 = vmatprep.subr.mxu0 0.0
    %264 = vmatpush1.msra.mxu0 0.0
    %265 = vmatprep.subr.mxu0 0.0
    %266 = vmatpush1.msra.mxu0 0.0
    %267 = vmatprep.subr.mxu0 0.0
    %268 = vmatpush1.msra.mxu0 0.0
    %269 = vmatprep.subr.mxu0 0.0
    %270 = vmatpush1.msra.mxu0 0.0
    %271 = vmatprep.subr.mxu0 0.0
    %272 = vmatpush1.msra.mxu0 0.0
    %273 = vmatprep.subr.mxu0 0.0
    %274 = vmatpush1.msra.mxu0 0.0
    %275 = vmatprep.subr.mxu0 0.0
    %276 = vmatpush1.msra.mxu0 0.0
    %277 = vmatprep.mubr.f32.mxu0 0.0
    %278 = vmatmul.mubr.f32.gmra.mrb[0].mxu0 %v181
    %v279 = vpop.f32.mrb[0].mxu0
    %v280 = vadd.f32 %v211, %v279
    %v281 = vpop.f32.mrb[0].mxu0
    %282 = vmatprep.mubr.f32.mxu0 0.0
    %283 = vmatmul.mubr.f32.gmra.mrb[0].mxu0 %v182
    %v284 = vpop.f32.mrb[0].mxu0
    %v285 = vadd.f32 %v211, %v284
    %v286 = vpop.f32.mrb[0].mxu0
    %287 = vmatprep.mubr.f32.mxu0 0.0
    %288 = vmatmul.mubr.f32.gmra.mrb[0].mxu0 %v183
    %v289 = vpop.f32.mrb[0].mxu0
    %v290 = vadd.f32 %v211, %v289
    %v291 = vpop.f32.mrb[0].mxu0
    %292 = vmatprep.mubr.f32.mxu0 0.0
    %293 = vmatmul.mubr.f32.gmra.mrb[0].mxu0 %v184
    %v294 = vpop.f32.mrb[0].mxu0
    %v295 = vadd.f32 %v211, %v294
    %v296 = vpop.f32.mrb[0].mxu0
    %297 = vmatprep.mubr.f32.mxu0 0.0
    %298 = vmatmul.mubr.f32.gmra.mrb[0].mxu0 %v185
    %v299 = vpop.f32.mrb[0].mxu0
    %v300 = vadd.f32 %v211, %v299
    %v301 = vpop.f32.mrb[0].mxu0
    %302 = vmatprep.mubr.f32.mxu0 0.0
    %303 = vmatmul.mubr.f32.gmra.mrb[0].mxu0 %v186
    %v304 = vpop.f32.mrb[0].mxu0
    %v305 = vadd.f32 %v211, %v304
    %v306 = vpop.f32.mrb[0].mxu0
    %307 = vmatprep.mubr.f32.mxu0 0.0
    %308 = vmatmul.mubr.f32.gmra.mrb[0].mxu0 %v187
    %v309 = vpop.f32.mrb[0].mxu0
    %v310 = vadd.f32 %v211, %v309
    %v311 = vpop.f32.mrb[0].mxu0
    %312 = vmatprep.mubr.f32.mxu0 0.0
    %313 = vmatmul.mubr.f32.gmra.mrb[0].mxu0 %v188
    %v314 = vpop.f32.mrb[0].mxu0
    %v315 = vadd.f32 %v211, %v314
    %v316 = vpop.f32.mrb[0].mxu0
    %317 = vdwg.mxu0
    %v318 = vmax.f32 %v280, 0.0
    %v319 = vmax.f32 %v285, 0.0
    %v320 = vmax.f32 %v290, 0.0
    %v321 = vmax.f32 %v295, 0.0
    %v322 = vmax.f32 %v300, 0.0
    %v323 = vmax.f32 %v305, 0.0
    %v324 = vmax.f32 %v310, 0.0
    %v325 = vmax.f32 %v315, 0.0
    %s326 = scalar_lea.vmem [#allocation2], 128
    %v327 = vld [vmem:[%s326] sm:$0xff]
    %v328 = vld [vmem:[%s326 + $0x8] sm:$0xff]
    %v329 = vld [vmem:[%s326 + $0x10] sm:$0xff]
    %v330 = vld [vmem:[%s326 + $0x18] sm:$0xff]
    %v331 = vld [vmem:[%s326 + $0x20] sm:$0xff]
    %v332 = vld [vmem:[%s326 + $0x28] sm:$0xff]
    %v333 = vld [vmem:[%s326 + $0x30] sm:$0xff]
    %v334 = vld [vmem:[%s326 + $0x38] sm:$0xff]
    %v335 = vld [vmem:[%s326 + $0x40] sm:$0xff]
    %v336 = vld [vmem:[%s326 + $0x48] sm:$0xff]
    %v337 = vld [vmem:[%s326 + $0x50] sm:$0xff]
    %v338 = vld [vmem:[%s326 + $0x58] sm:$0xff]
    %v339 = vld [vmem:[%s326 + $0x60] sm:$0xff]
    %v340 = vld [vmem:[%s326 + $0x68] sm:$0xff]
    %v341 = vld [vmem:[%s326 + $0x70] sm:$0xff]
    %v342 = vld [vmem:[%s326 + $0x78] sm:$0xff]
    %s343 = scalar_lea.vmem %s3, 2
    %v344 = vld [vmem:[%s343] sm:$0x1]
    %v346 = vlaneseq
    %v347 = vshrl.u32 %v346, 7
    %v348 = vsub.s32 0, %v347
    %v349 = vrot.slane %v344, %v348
    %351 = vmatprep.subr.mxu0 0.0
    %352 = vmatpush1.msra.mxu0 %v327
    %353 = vmatprep.subr.mxu0 0.0
    %354 = vmatpush1.msra.mxu0 %v328
    %355 = vmatprep.subr.mxu0 0.0
    %356 = vmatpush1.msra.mxu0 %v329
    %357 = vmatprep.subr.mxu0 0.0
    %358 = vmatpush1.msra.mxu0 %v330
    %359 = vmatprep.subr.mxu0 0.0
    %360 = vmatpush1.msra.mxu0 %v331
    %361 = vmatprep.subr.mxu0 0.0
    %362 = vmatpush1.msra.mxu0 %v332
    %363 = vmatprep.subr.mxu0 0.0
    %364 = vmatpush1.msra.mxu0 %v333
    %365 = vmatprep.subr.mxu0 0.0
    %366 = vmatpush1.msra.mxu0 %v334
    %367 = vmatprep.subr.mxu0 0.0
    %368 = vmatpush1.msra.mxu0 %v335
    %369 = vmatprep.subr.mxu0 0.0
    %370 = vmatpush1.msra.mxu0 %v336
    %371 = vmatprep.subr.mxu0 0.0
    %372 = vmatpush1.msra.mxu0 %v337
    %373 = vmatprep.subr.mxu0 0.0
    %374 = vmatpush1.msra.mxu0 %v338
    %375 = vmatprep.subr.mxu0 0.0
    %376 = vmatpush1.msra.mxu0 %v339
    %377 = vmatprep.subr.mxu0 0.0
    %378 = vmatpush1.msra.mxu0 %v340
    %379 = vmatprep.subr.mxu0 0.0
    %380 = vmatpush1.msra.mxu0 %v341
    %381 = vmatprep.subr.mxu0 0.0
    %382 = vmatpush1.msra.mxu0 %v342
    %383 = vmatprep.subr.mxu0 0.0
    %384 = vmatpush1.msra.mxu0 0.0
    %385 = vmatprep.subr.mxu0 0.0
    %386 = vmatpush1.msra.mxu0 0.0
    %387 = vmatprep.subr.mxu0 0.0
    %388 = vmatpush1.msra.mxu0 0.0
    %389 = vmatprep.subr.mxu0 0.0
    %390 = vmatpush1.msra.mxu0 0.0
    %391 = vmatprep.subr.mxu0 0.0
    %392 = vmatpush1.msra.mxu0 0.0
    %393 = vmatprep.subr.mxu0 0.0
    %394 = vmatpush1.msra.mxu0 0.0
    %395 = vmatprep.subr.mxu0 0.0
    %396 = vmatpush1.msra.mxu0 0.0
    %397 = vmatprep.subr.mxu0 0.0
    %398 = vmatpush1.msra.mxu0 0.0
    %399 = vmatprep.subr.mxu0 0.0
    %400 = vmatpush1.msra.mxu0 0.0
    %401 = vmatprep.subr.mxu0 0.0
    %402 = vmatpush1.msra.mxu0 0.0
    %403 = vmatprep.subr.mxu0 0.0
    %404 = vmatpush1.msra.mxu0 0.0
    %405 = vmatprep.subr.mxu0 0.0
    %406 = vmatpush1.msra.mxu0 0.0
    %407 = vmatprep.subr.mxu0 0.0
    %408 = vmatpush1.msra.mxu0 0.0
    %409 = vmatprep.subr.mxu0 0.0
    %410 = vmatpush1.msra.mxu0 0.0
    %411 = vmatprep.subr.mxu0 0.0
    %412 = vmatpush1.msra.mxu0 0.0
    %413 = vmatprep.subr.mxu0 0.0
    %414 = vmatpush1.msra.mxu0 0.0
    %415 = vmatprep.mubr.f32.mxu0 0.0
    %416 = vmatmul.mubr.f32.gmra.mrb[0].mxu0 %v318
    %v417 = vpop.f32.mrb[0].mxu0
    %v418 = vadd.f32 %v349, %v417
    %v419 = vpop.f32.mrb[0].mxu0
    %420 = vmatprep.mubr.f32.mxu0 0.0
    %421 = vmatmul.mubr.f32.gmra.mrb[0].mxu0 %v319
    %v422 = vpop.f32.mrb[0].mxu0
    %v423 = vadd.f32 %v349, %v422
    %v424 = vpop.f32.mrb[0].mxu0
    %425 = vmatprep.mubr.f32.mxu0 0.0
    %426 = vmatmul.mubr.f32.gmra.mrb[0].mxu0 %v320
    %v427 = vpop.f32.mrb[0].mxu0
    %v428 = vadd.f32 %v349, %v427
    %v429 = vpop.f32.mrb[0].mxu0
    %430 = vmatprep.mubr.f32.mxu0 0.0
    %431 = vmatmul.mubr.f32.gmra.mrb[0].mxu0 %v321
    %v432 = vpop.f32.mrb[0].mxu0
    %v433 = vadd.f32 %v349, %v432
    %v434 = vpop.f32.mrb[0].mxu0
    %435 = vmatprep.mubr.f32.mxu0 0.0
    %436 = vmatmul.mubr.f32.gmra.mrb[0].mxu0 %v322
    %v437 = vpop.f32.mrb[0].mxu0
    %v438 = vadd.f32 %v349, %v437
    %v439 = vpop.f32.mrb[0].mxu0
    %440 = vmatprep.mubr.f32.mxu0 0.0
    %441 = vmatmul.mubr.f32.gmra.mrb[0].mxu0 %v323
    %v442 = vpop.f32.mrb[0].mxu0
    %v443 = vadd.f32 %v349, %v442
    %v444 = vpop.f32.mrb[0].mxu0
    %445 = vmatprep.mubr.f32.mxu0 0.0
    %446 = vmatmul.mubr.f32.gmra.mrb[0].mxu0 %v324
    %v447 = vpop.f32.mrb[0].mxu0
    %v448 = vadd.f32 %v349, %v447
    %v449 = vpop.f32.mrb[0].mxu0
    %450 = vmatprep.mubr.f32.mxu0 0.0
    %451 = vmatmul.mubr.f32.gmra.mrb[0].mxu0 %v325
    %v452 = vpop.f32.mrb[0].mxu0
    %v453 = vadd.f32 %v349, %v452
    %v454 = vpop.f32.mrb[0].mxu0
    %455 = vdwg.mxu0
    %456 = vst [vmem:[#allocation5] sm:$0xff] %v418
    %457 = vst [vmem:[#allocation5 + $0x8] sm:$0xff] %v423
    %458 = vst [vmem:[#allocation5 + $0x10] sm:$0xff] %v428
    %459 = vst [vmem:[#allocation5 + $0x18] sm:$0xff] %v433
    %460 = vst [vmem:[#allocation5 + $0x20] sm:$0xff] %v438
    %461 = vst [vmem:[#allocation5 + $0x28] sm:$0xff] %v443
    %462 = vst [vmem:[#allocation5 + $0x30] sm:$0xff] %v448
    %463 = vst [vmem:[#allocation5 + $0x38] sm:$0xff] %v453
    // Predicated region
    $region22: #{tpu_custom_call.1} parent=1 // pred_check
      _
    $region23: #{tpu_custom_call.1} parent=1 // pred_check_branch
      %465 = sbr.rel (0) target = $region25
    $region24: #{tpu_custom_call.1} parent=1 // pred_region
      %s467 = ssub.s32 1024, 1024
      %468 = vsyncadd [#allocation4], %s467
      %s469 = sshll.u32 [#allocation5], 4
      %s470 = int_to_ptr.vmem [resolvable:$true] %s469
      %475 = dma.vmem_to_hbm [thread:$0]  %s470, 1024, %s4, [#allocation4], 128, 128, 8
    $region25: #{tpu_custom_call.1} parent=1 // pred_fallthru
      _
    // Predicated region
    $region26: #{tpu_custom_call.1} parent=1 // pred_check
      _
    $region27: #{tpu_custom_call.1} parent=1 // pred_check_branch
      %477 = sbr.rel (0) target = $region29
    $region28: #{tpu_custom_call.1} parent=1 // pred_region
      %478 = dma.done [#allocation4], 1024
    $region29: #{tpu_custom_call.1} parent=1 // pred_fallthru
      _
    %479 = vsyncpa [#allocation3], 1
    %480 = vsyncpa [#allocation4], 1

</llo_original>
